<compile_context>
chip_gen: v7x
topology: tpu7x:2x2x1
jax: 0.10.0
libtpu: 0.0.40
codegen_flags: <defaults>
</compile_context>

<pallas_src>
import functools

import jax
import jax.numpy as jnp
from jax import lax
from jax.experimental import pallas as pl
from jax.experimental.pallas import tpu as pltpu


def _sam_kernel(x_ref, w_ref, b_ref, o_ref, *, chunk_rows):
    # x_ref / o_ref : (C, S, 128) block -- per-channel dense (S, 128) slabs.
    # w_ref         : (C, C) conv weight with BN scale folded in, in SMEM.
    # b_ref         : (C,)   folded BN bias, in SMEM.
    C, S, _ = x_ref.shape
    n_chunks = S // chunk_rows

    # Hoist the tiny SMEM scalar reads out of the streaming loop.
    w = [[w_ref[co, ci] for ci in range(C)] for co in range(C)]
    b = [b_ref[co] for co in range(C)]

    def chunk(i, carry):
        r = pl.multiple_of(i * chunk_rows, chunk_rows)
        rows = pl.ds(r, chunk_rows)
        # Load each input channel's row-chunk once (few vregs live at a time).
        xs = [x_ref[ci, rows, :].astype(jnp.float32) for ci in range(C)]
        for co in range(C):
            z = xs[0] * w[co][0]
            for ci in range(1, C):
                z = z + xs[ci] * w[co][ci]
            z = jnp.maximum(z + b[co], -30.0)          # clamp: exp stays finite
            # sigmoid(z) = 1 / (1 + exp(-z)): one EUP exp + one approx EUP
            # reciprocal, refined with a single VPU Newton step (f32-accurate).
            e1 = 1.0 + jnp.exp(-z)
            rcp = pl.reciprocal(e1, approx=True)
            rcp = rcp * (2.0 - e1 * rcp)
            o_ref[co, rows, :] = (rcp * xs[co]).astype(o_ref.dtype)
        return carry

    lax.fori_loop(0, n_chunks, chunk, 0, unroll=(n_chunks <= 16))


def _pick_block_rows(R, C, itemsize, *, target_step_bytes=4 << 20,
                     vmem_budget=12 << 20):
    """Rows-of-128 per grid step: a divisor of R that is a multiple of 8 (or the
    full extent), sized so (in+out) x double-buffer stays inside the VMEM budget
    while each step still moves a multi-MB payload."""
    bytes_per_row = C * 128 * itemsize                      # one dir, all channels
    cap_vmem = max(1, vmem_budget // (4 * bytes_per_row))   # in+out, double-buffered
    cap_target = max(1, target_step_bytes // (2 * bytes_per_row))
    cap = min(cap_vmem, cap_target)
    if R <= cap:
        return R                                            # full extent: legal block
    s = (cap // 8) * 8
    while s >= 8:
        if R % s == 0:
            return s
        s -= 8
    return R  # no aligned divisor fits; fall back to full extent


def _pick_chunk_rows(S):
    for c in (16, 8):
        if S % c == 0:
            return c
    for c in range(min(S, 16), 0, -1):                      # small / unaligned S
        if S % c == 0:
            return c
    return S


@jax.jit
def attention_sam_pallas(x_nchw, w_oi, bias):
    """x_nchw: (N, C, H, W); w_oi: (Cout, Cin) BN-scale-folded 1x1 weight; bias: (Cout,).

    Inference-mode BN fold only (running statistics)."""
    N, C, H, W = x_nchw.shape
    Cout, Cin = w_oi.shape
    assert Cin == C and Cout == C, "SAM requires out_channels == in_channels"

    HW = H * W
    if HW % 128 == 0:
        R, L = HW // 128, 128        # dense 128-lane rows per channel
    else:
        R, L = 1, HW                 # full-extent lanes fallback (still legal)
    x4 = x_nchw.reshape(N, C, R, L)  # trailing-dim reshape

    itemsize = jnp.dtype(x_nchw.dtype).itemsize
    S = _pick_block_rows(R, C, itemsize)
    chunk_rows = _pick_chunk_rows(S)
    grid = (N, R // S)

    kernel = functools.partial(_sam_kernel, chunk_rows=chunk_rows)
    out = pl.pallas_call(
        kernel,
        out_shape=jax.ShapeDtypeStruct((N, C, R, L), x_nchw.dtype),
        grid=grid,
        in_specs=[
            pl.BlockSpec((None, C, S, L), lambda n, j: (n, 0, j, 0)),
            pl.BlockSpec(memory_space=pltpu.MemorySpace.SMEM),
            pl.BlockSpec(memory_space=pltpu.MemorySpace.SMEM),
        ],
        out_specs=pl.BlockSpec((None, C, S, L), lambda n, j: (n, 0, j, 0)),
        compiler_params=pltpu.CompilerParams(
            dimension_semantics=("parallel", "parallel")),
    )(x4, w_oi, bias)

    return out.reshape(N, C, H, W)


def _reference(x_nchw, w_oi, bias):
    # Pure-JAX reference in NCHW: sigmoid(conv1x1_folded(x) + bias) * x.
    xf = x_nchw.astype(jnp.float32)
    z = jnp.einsum("oc,nchw->nohw", w_oi, xf) + bias[None, :, None, None]
    return (jax.nn.sigmoid(z) * xf).astype(x_nchw.dtype)


if __name__ == "__main__":
    # Module config: AttentionSAM(in_channels=4, out_channels=4, kernel_size=1)
    N, C, H, W = 2, 4, 16, 16
    key = jax.random.PRNGKey(0)
    k_x, k_w, k_g, k_b, k_m, k_v = jax.random.split(key, 6)

    x = jax.random.normal(k_x, (N, C, H, W), dtype=jnp.float32)

    # Conv weight, PyTorch shape (Cout, Cin, 1, 1); no conv bias (BN follows).
    w_torch = jax.random.normal(k_w, (C, C, 1, 1), dtype=jnp.float32) * 0.1

    # BatchNorm params / running stats (deterministic), inference-mode fold.
    gamma = 1.0 + 0.1 * jax.random.normal(k_g, (C,), dtype=jnp.float32)
    beta = 0.1 * jax.random.normal(k_b, (C,), dtype=jnp.float32)
    running_mean = 0.1 * jax.random.normal(k_m, (C,), dtype=jnp.float32)
    running_var = jnp.abs(1.0 + 0.1 * jax.random.normal(k_v, (C,), dtype=jnp.float32))
    eps = 1e-5

    scale = gamma / jnp.sqrt(running_var + eps)           # (Cout,)
    w_oi = w_torch[:, :, 0, 0] * scale[:, None]           # fold BN scale into weight
    bias = beta - running_mean * scale                    # (Cout,)

    out = jax.block_until_ready(attention_sam_pallas(x, w_oi, bias))
    ref = _reference(x, w_oi, bias)

    assert out.shape == (N, C, H, W)
    assert jnp.allclose(out, ref, atol=1e-4, rtol=1e-4), "mismatch vs reference"

    print("KERNEL_OK")
</pallas_src>

<mosaic_0001>
module attributes {stable_mosaic.version = 11 : i64} {
  func.func @_sam_kernel(%arg0: i32, %arg1: i32, %arg2: memref<1x4x2x128xf32, #tpu.memory_space<vmem>>, %arg3: memref<4x4xf32, #tpu.memory_space<smem>>, %arg4: memref<4xf32, #tpu.memory_space<smem>>, %arg5: memref<1x4x2x128xf32, #tpu.memory_space<vmem>>) attributes {dimension_semantics = [#tpu.dimension_semantics<parallel>, #tpu.dimension_semantics<parallel>], iteration_bounds = array<i64: 2, 1>, scalar_prefetch = 0 : i64, scratch_operands = 0 : i64, tpu.core_type = #tpu.core_type<tc>, window_params = [{transform_indices = @transform_0, window_bounds = array<i64: 1, 4, 2, 128>}, {transform_indices = @transform_1, window_bounds = array<i64: 4, 4>}, {transform_indices = @transform_2, window_bounds = array<i64: 4>}, {transform_indices = @transform_3, window_bounds = array<i64: 1, 4, 2, 128>}]} {
    %c0 = arith.constant 0 : index
    %c0_0 = arith.constant 0 : index
    %0 = memref.load %arg3[%c0, %c0_0] : memref<4x4xf32, #tpu.memory_space<smem>>
    %c0_1 = arith.constant 0 : index
    %c1 = arith.constant 1 : index
    %1 = memref.load %arg3[%c0_1, %c1] : memref<4x4xf32, #tpu.memory_space<smem>>
    %c0_2 = arith.constant 0 : index
    %c2 = arith.constant 2 : index
    %2 = memref.load %arg3[%c0_2, %c2] : memref<4x4xf32, #tpu.memory_space<smem>>
    %c0_3 = arith.constant 0 : index
    %c3 = arith.constant 3 : index
    %3 = memref.load %arg3[%c0_3, %c3] : memref<4x4xf32, #tpu.memory_space<smem>>
    %c1_4 = arith.constant 1 : index
    %c0_5 = arith.constant 0 : index
    %4 = memref.load %arg3[%c1_4, %c0_5] : memref<4x4xf32, #tpu.memory_space<smem>>
    %c1_6 = arith.constant 1 : index
    %c1_7 = arith.constant 1 : index
    %5 = memref.load %arg3[%c1_6, %c1_7] : memref<4x4xf32, #tpu.memory_space<smem>>
    %c1_8 = arith.constant 1 : index
    %c2_9 = arith.constant 2 : index
    %6 = memref.load %arg3[%c1_8, %c2_9] : memref<4x4xf32, #tpu.memory_space<smem>>
    %c1_10 = arith.constant 1 : index
    %c3_11 = arith.constant 3 : index
    %7 = memref.load %arg3[%c1_10, %c3_11] : memref<4x4xf32, #tpu.memory_space<smem>>
    %c2_12 = arith.constant 2 : index
    %c0_13 = arith.constant 0 : index
    %8 = memref.load %arg3[%c2_12, %c0_13] : memref<4x4xf32, #tpu.memory_space<smem>>
    %c2_14 = arith.constant 2 : index
    %c1_15 = arith.constant 1 : index
    %9 = memref.load %arg3[%c2_14, %c1_15] : memref<4x4xf32, #tpu.memory_space<smem>>
    %c2_16 = arith.constant 2 : index
    %c2_17 = arith.constant 2 : index
    %10 = memref.load %arg3[%c2_16, %c2_17] : memref<4x4xf32, #tpu.memory_space<smem>>
    %c2_18 = arith.constant 2 : index
    %c3_19 = arith.constant 3 : index
    %11 = memref.load %arg3[%c2_18, %c3_19] : memref<4x4xf32, #tpu.memory_space<smem>>
    %c3_20 = arith.constant 3 : index
    %c0_21 = arith.constant 0 : index
    %12 = memref.load %arg3[%c3_20, %c0_21] : memref<4x4xf32, #tpu.memory_space<smem>>
    %c3_22 = arith.constant 3 : index
    %c1_23 = arith.constant 1 : index
    %13 = memref.load %arg3[%c3_22, %c1_23] : memref<4x4xf32, #tpu.memory_space<smem>>
    %c3_24 = arith.constant 3 : index
    %c2_25 = arith.constant 2 : index
    %14 = memref.load %arg3[%c3_24, %c2_25] : memref<4x4xf32, #tpu.memory_space<smem>>
    %c3_26 = arith.constant 3 : index
    %c3_27 = arith.constant 3 : index
    %15 = memref.load %arg3[%c3_26, %c3_27] : memref<4x4xf32, #tpu.memory_space<smem>>
    %c0_28 = arith.constant 0 : index
    %16 = memref.load %arg4[%c0_28] : memref<4xf32, #tpu.memory_space<smem>>
    %c1_29 = arith.constant 1 : index
    %17 = memref.load %arg4[%c1_29] : memref<4xf32, #tpu.memory_space<smem>>
    %c2_30 = arith.constant 2 : index
    %18 = memref.load %arg4[%c2_30] : memref<4xf32, #tpu.memory_space<smem>>
    %c3_31 = arith.constant 3 : index
    %19 = memref.load %arg4[%c3_31] : memref<4xf32, #tpu.memory_space<smem>>
    %c0_i32 = arith.constant 0 : i32
    %c2_i32 = arith.constant 2 : i32
    %20 = arith.muli %c0_i32, %c2_i32 : i32
    %21 = tpu.assume_multiple %20, 2 : i32
    %c0_32 = arith.constant 0 : index
    %c0_33 = arith.constant 0 : index
    %22 = arith.index_cast %21 : i32 to index
    %c0_34 = arith.constant 0 : index
    %23 = vector.load %arg2[%c0_32, %c0_33, %22, %c0_34] : memref<1x4x2x128xf32, #tpu.memory_space<vmem>>, vector<1x1x2x128xf32>
    %24 = vector.shape_cast %23 : vector<1x1x2x128xf32> to vector<2x128xf32>
    %c0_35 = arith.constant 0 : index
    %c1_36 = arith.constant 1 : index
    %25 = arith.index_cast %21 : i32 to index
    %c0_37 = arith.constant 0 : index
    %26 = vector.load %arg2[%c0_35, %c1_36, %25, %c0_37] : memref<1x4x2x128xf32, #tpu.memory_space<vmem>>, vector<1x1x2x128xf32>
    %27 = vector.shape_cast %26 : vector<1x1x2x128xf32> to vector<2x128xf32>
    %c0_38 = arith.constant 0 : index
    %c2_39 = arith.constant 2 : index
    %28 = arith.index_cast %21 : i32 to index
    %c0_40 = arith.constant 0 : index
    %29 = vector.load %arg2[%c0_38, %c2_39, %28, %c0_40] : memref<1x4x2x128xf32, #tpu.memory_space<vmem>>, vector<1x1x2x128xf32>
    %30 = vector.shape_cast %29 : vector<1x1x2x128xf32> to vector<2x128xf32>
    %c0_41 = arith.constant 0 : index
    %c3_42 = arith.constant 3 : index
    %31 = arith.index_cast %21 : i32 to index
    %c0_43 = arith.constant 0 : index
    %32 = vector.load %arg2[%c0_41, %c3_42, %31, %c0_43] : memref<1x4x2x128xf32, #tpu.memory_space<vmem>>, vector<1x1x2x128xf32>
    %33 = vector.shape_cast %32 : vector<1x1x2x128xf32> to vector<2x128xf32>
    %34 = vector.broadcast %0 : f32 to vector<2x128xf32>
    %35 = arith.mulf %24, %34 : vector<2x128xf32>
    %36 = vector.broadcast %1 : f32 to vector<2x128xf32>
    %37 = arith.mulf %27, %36 : vector<2x128xf32>
    %38 = arith.addf %35, %37 : vector<2x128xf32>
    %39 = vector.broadcast %2 : f32 to vector<2x128xf32>
    %40 = arith.mulf %30, %39 : vector<2x128xf32>
    %41 = arith.addf %38, %40 : vector<2x128xf32>
    %42 = vector.broadcast %3 : f32 to vector<2x128xf32>
    %43 = arith.mulf %33, %42 : vector<2x128xf32>
    %44 = arith.addf %41, %43 : vector<2x128xf32>
    %45 = vector.broadcast %16 : f32 to vector<2x128xf32>
    %46 = arith.addf %44, %45 : vector<2x128xf32>
    %cst = arith.constant -3.000000e+01 : f32
    %47 = vector.broadcast %cst : f32 to vector<2x128xf32>
    %48 = arith.maximumf %46, %47 : vector<2x128xf32>
    %cst_44 = arith.constant 0.000000e+00 : f32
    %49 = vector.broadcast %cst_44 : f32 to vector<2x128xf32>
    %50 = arith.subf %49, %48 : vector<2x128xf32>
    %51 = math.exp %50 : vector<2x128xf32>
    %cst_45 = arith.constant 1.000000e+00 : f32
    %52 = vector.broadcast %cst_45 : f32 to vector<2x128xf32>
    %53 = arith.addf %52, %51 : vector<2x128xf32>
    %54 = tpu.reciprocal %53 {approx = true} : vector<2x128xf32> -> vector<2x128xf32>
    %55 = arith.mulf %53, %54 : vector<2x128xf32>
    %cst_46 = arith.constant 2.000000e+00 : f32
    %56 = vector.broadcast %cst_46 : f32 to vector<2x128xf32>
    %57 = arith.subf %56, %55 : vector<2x128xf32>
    %58 = arith.mulf %54, %57 : vector<2x128xf32>
    %59 = arith.mulf %58, %24 : vector<2x128xf32>
    %c0_47 = arith.constant 0 : index
    %c0_48 = arith.constant 0 : index
    %60 = arith.index_cast %21 : i32 to index
    %c0_49 = arith.constant 0 : index
    %61 = vector.load %arg5[%c0_47, %c0_48, %60, %c0_49] : memref<1x4x2x128xf32, #tpu.memory_space<vmem>>, vector<1x1x2x128xf32>
    %62 = vector.shape_cast %61 : vector<1x1x2x128xf32> to vector<2x128xf32>
    %63 = vector.shape_cast %59 : vector<2x128xf32> to vector<1x1x2x128xf32>
    tpu.vector_store %arg5[%c0_47, %c0_48, %60, %c0_49], %63 {strides = array<i32>} : memref<1x4x2x128xf32, #tpu.memory_space<vmem>>, vector<1x1x2x128xf32>,
    %64 = vector.broadcast %4 : f32 to vector<2x128xf32>
    %65 = arith.mulf %24, %64 : vector<2x128xf32>
    %66 = vector.broadcast %5 : f32 to vector<2x128xf32>
    %67 = arith.mulf %27, %66 : vector<2x128xf32>
    %68 = arith.addf %65, %67 : vector<2x128xf32>
    %69 = vector.broadcast %6 : f32 to vector<2x128xf32>
    %70 = arith.mulf %30, %69 : vector<2x128xf32>
    %71 = arith.addf %68, %70 : vector<2x128xf32>
    %72 = vector.broadcast %7 : f32 to vector<2x128xf32>
    %73 = arith.mulf %33, %72 : vector<2x128xf32>
    %74 = arith.addf %71, %73 : vector<2x128xf32>
    %75 = vector.broadcast %17 : f32 to vector<2x128xf32>
    %76 = arith.addf %74, %75 : vector<2x128xf32>
    %cst_50 = arith.constant -3.000000e+01 : f32
    %77 = vector.broadcast %cst_50 : f32 to vector<2x128xf32>
    %78 = arith.maximumf %76, %77 : vector<2x128xf32>
    %cst_51 = arith.constant 0.000000e+00 : f32
    %79 = vector.broadcast %cst_51 : f32 to vector<2x128xf32>
    %80 = arith.subf %79, %78 : vector<2x128xf32>
    %81 = math.exp %80 : vector<2x128xf32>
    %cst_52 = arith.constant 1.000000e+00 : f32
    %82 = vector.broadcast %cst_52 : f32 to vector<2x128xf32>
    %83 = arith.addf %82, %81 : vector<2x128xf32>
    %84 = tpu.reciprocal %83 {approx = true} : vector<2x128xf32> -> vector<2x128xf32>
    %85 = arith.mulf %83, %84 : vector<2x128xf32>
    %cst_53 = arith.constant 2.000000e+00 : f32
    %86 = vector.broadcast %cst_53 : f32 to vector<2x128xf32>
    %87 = arith.subf %86, %85 : vector<2x128xf32>
    %88 = arith.mulf %84, %87 : vector<2x128xf32>
    %89 = arith.mulf %88, %27 : vector<2x128xf32>
    %c0_54 = arith.constant 0 : index
    %c1_55 = arith.constant 1 : index
    %90 = arith.index_cast %21 : i32 to index
    %c0_56 = arith.constant 0 : index
    %91 = vector.load %arg5[%c0_54, %c1_55, %90, %c0_56] : memref<1x4x2x128xf32, #tpu.memory_space<vmem>>, vector<1x1x2x128xf32>
    %92 = vector.shape_cast %91 : vector<1x1x2x128xf32> to vector<2x128xf32>
    %93 = vector.shape_cast %89 : vector<2x128xf32> to vector<1x1x2x128xf32>
    tpu.vector_store %arg5[%c0_54, %c1_55, %90, %c0_56], %93 {strides = array<i32>} : memref<1x4x2x128xf32, #tpu.memory_space<vmem>>, vector<1x1x2x128xf32>,
    %94 = vector.broadcast %8 : f32 to vector<2x128xf32>
    %95 = arith.mulf %24, %94 : vector<2x128xf32>
    %96 = vector.broadcast %9 : f32 to vector<2x128xf32>
    %97 = arith.mulf %27, %96 : vector<2x128xf32>
    %98 = arith.addf %95, %97 : vector<2x128xf32>
    %99 = vector.broadcast %10 : f32 to vector<2x128xf32>
    %100 = arith.mulf %30, %99 : vector<2x128xf32>
    %101 = arith.addf %98, %100 : vector<2x128xf32>
    %102 = vector.broadcast %11 : f32 to vector<2x128xf32>
    %103 = arith.mulf %33, %102 : vector<2x128xf32>
    %104 = arith.addf %101, %103 : vector<2x128xf32>
    %105 = vector.broadcast %18 : f32 to vector<2x128xf32>
    %106 = arith.addf %104, %105 : vector<2x128xf32>
    %cst_57 = arith.constant -3.000000e+01 : f32
    %107 = vector.broadcast %cst_57 : f32 to vector<2x128xf32>
    %108 = arith.maximumf %106, %107 : vector<2x128xf32>
    %cst_58 = arith.constant 0.000000e+00 : f32
    %109 = vector.broadcast %cst_58 : f32 to vector<2x128xf32>
    %110 = arith.subf %109, %108 : vector<2x128xf32>
    %111 = math.exp %110 : vector<2x128xf32>
    %cst_59 = arith.constant 1.000000e+00 : f32
    %112 = vector.broadcast %cst_59 : f32 to vector<2x128xf32>
    %113 = arith.addf %112, %111 : vector<2x128xf32>
    %114 = tpu.reciprocal %113 {approx = true} : vector<2x128xf32> -> vector<2x128xf32>
    %115 = arith.mulf %113, %114 : vector<2x128xf32>
    %cst_60 = arith.constant 2.000000e+00 : f32
    %116 = vector.broadcast %cst_60 : f32 to vector<2x128xf32>
    %117 = arith.subf %116, %115 : vector<2x128xf32>
    %118 = arith.mulf %114, %117 : vector<2x128xf32>
    %119 = arith.mulf %118, %30 : vector<2x128xf32>
    %c0_61 = arith.constant 0 : index
    %c2_62 = arith.constant 2 : index
    %120 = arith.index_cast %21 : i32 to index
    %c0_63 = arith.constant 0 : index
    %121 = vector.load %arg5[%c0_61, %c2_62, %120, %c0_63] : memref<1x4x2x128xf32, #tpu.memory_space<vmem>>, vector<1x1x2x128xf32>
    %122 = vector.shape_cast %121 : vector<1x1x2x128xf32> to vector<2x128xf32>
    %123 = vector.shape_cast %119 : vector<2x128xf32> to vector<1x1x2x128xf32>
    tpu.vector_store %arg5[%c0_61, %c2_62, %120, %c0_63], %123 {strides = array<i32>} : memref<1x4x2x128xf32, #tpu.memory_space<vmem>>, vector<1x1x2x128xf32>,
    %124 = vector.broadcast %12 : f32 to vector<2x128xf32>
    %125 = arith.mulf %24, %124 : vector<2x128xf32>
    %126 = vector.broadcast %13 : f32 to vector<2x128xf32>
    %127 = arith.mulf %27, %126 : vector<2x128xf32>
    %128 = arith.addf %125, %127 : vector<2x128xf32>
    %129 = vector.broadcast %14 : f32 to vector<2x128xf32>
    %130 = arith.mulf %30, %129 : vector<2x128xf32>
    %131 = arith.addf %128, %130 : vector<2x128xf32>
    %132 = vector.broadcast %15 : f32 to vector<2x128xf32>
    %133 = arith.mulf %33, %132 : vector<2x128xf32>
    %134 = arith.addf %131, %133 : vector<2x128xf32>
    %135 = vector.broadcast %19 : f32 to vector<2x128xf32>
    %136 = arith.addf %134, %135 : vector<2x128xf32>
    %cst_64 = arith.constant -3.000000e+01 : f32
    %137 = vector.broadcast %cst_64 : f32 to vector<2x128xf32>
    %138 = arith.maximumf %136, %137 : vector<2x128xf32>
    %cst_65 = arith.constant 0.000000e+00 : f32
    %139 = vector.broadcast %cst_65 : f32 to vector<2x128xf32>
    %140 = arith.subf %139, %138 : vector<2x128xf32>
    %141 = math.exp %140 : vector<2x128xf32>
    %cst_66 = arith.constant 1.000000e+00 : f32
    %142 = vector.broadcast %cst_66 : f32 to vector<2x128xf32>
    %143 = arith.addf %142, %141 : vector<2x128xf32>
    %144 = tpu.reciprocal %143 {approx = true} : vector<2x128xf32> -> vector<2x128xf32>
    %145 = arith.mulf %143, %144 : vector<2x128xf32>
    %cst_67 = arith.constant 2.000000e+00 : f32
    %146 = vector.broadcast %cst_67 : f32 to vector<2x128xf32>
    %147 = arith.subf %146, %145 : vector<2x128xf32>
    %148 = arith.mulf %144, %147 : vector<2x128xf32>
    %149 = arith.mulf %148, %33 : vector<2x128xf32>
    %c0_68 = arith.constant 0 : index
    %c3_69 = arith.constant 3 : index
    %150 = arith.index_cast %21 : i32 to index
    %c0_70 = arith.constant 0 : index
    %151 = vector.load %arg5[%c0_68, %c3_69, %150, %c0_70] : memref<1x4x2x128xf32, #tpu.memory_space<vmem>>, vector<1x1x2x128xf32>
    %152 = vector.shape_cast %151 : vector<1x1x2x128xf32> to vector<2x128xf32>
    %153 = vector.shape_cast %149 : vector<2x128xf32> to vector<1x1x2x128xf32>
    tpu.vector_store %arg5[%c0_68, %c3_69, %150, %c0_70], %153 {strides = array<i32>} : memref<1x4x2x128xf32, #tpu.memory_space<vmem>>, vector<1x1x2x128xf32>,
    %c1_i32 = arith.constant 1 : i32
    return
  }
  func.func @transform_0(%arg0: i32, %arg1: i32) -> (i32, i32, i32, i32) {
    %c0_i32 = arith.constant 0 : i32
    %c0_i32_0 = arith.constant 0 : i32
    %c0_i32_1 = arith.constant 0 : i32
    return %arg0, %c0_i32, %arg1, %c0_i32_0 : i32, i32, i32, i32
  }
  func.func @transform_1(%arg0: i32, %arg1: i32) -> (i32, i32) {
    %c0_i32 = arith.constant 0 : i32
    %c0_i32_0 = arith.constant 0 : i32
    %c0_i32_1 = arith.constant 0 : i32
    return %c0_i32, %c0_i32_0 : i32, i32
  }
  func.func @transform_2(%arg0: i32, %arg1: i32) -> i32 {
    %c0_i32 = arith.constant 0 : i32
    %c0_i32_0 = arith.constant 0 : i32
    return %c0_i32 : i32
  }
  func.func @transform_3(%arg0: i32, %arg1: i32) -> (i32, i32, i32, i32) {
    %c0_i32 = arith.constant 0 : i32
    %c0_i32_0 = arith.constant 0 : i32
    %c0_i32_1 = arith.constant 0 : i32
    return %arg0, %c0_i32, %arg1, %c0_i32_0 : i32, i32, i32, i32
  }
}

</mosaic_0001>

<llo_original>
// kernel: attention_sam_pallas.1
$region0: #{attention_sam_pallas.1}
  #allocation0 [shape = 'u32[]', space=smem, size = 0x4, offset = 0x4, fixed_abs, tag = 'smem constant byte address 0x4 - core index']
  #allocation1 [shape = 'u32[144,128]{1,0:T(1,128)}', space=vmem, size = 0x12000, scoped, tag = 'internal scratch']
  %s0 = inlined_call_operand.vmem [shape: f32[2,4,2,128], index: 0, kind: input, shape index: {}]
  %s1 = inlined_call_operand.vmem [shape: f32[4,4], index: 1, kind: input, shape index: {}]
  %s2 = inlined_call_operand.vmem [shape: f32[4], index: 2, kind: input, shape index: {}]
  %s3 = inlined_call_operand.vmem [shape: f32[2,4,2,128], index: 3, kind: output, shape index: {}]
  %s4 = sld [smem:[#allocation0]]
  $region53: #{attention_sam_pallas.1} parent=0
    _
  %s6 = ssub.s32 1, %s4
  %s7 = scalar_select 0, %s6, %s4
  $region1: #{attention_sam_pallas.1} parent=0
    #allocation2 [shape = 'u8[2048]{0}', space=smem, size = 0x800, scoped, tag = 'input window, operand 1, single buffered']
    #allocation3 [shape = 's32[2]{0}', space=sflag, size = 0x8, scoped, tag = 'scoped memory for attention_sam_pallas.1']
    #allocation4 [shape = 'u8[512]{0}', space=smem, size = 0x200, scoped, tag = 'input window, operand 2, single buffered']
    #allocation5 [shape = 's32[1]{0}', space=sflag, size = 0x4, scoped, tag = 'scoped memory for attention_sam_pallas.1']
    %8 = vsyncpa [#allocation3], 0
    %9 = vsyncpa [#allocation5], 0
    loop: start=0, step=1, limit=4
    $region2: #{attention_sam_pallas.1} parent=1 // loop_pre_header
      _
    $region3: #{attention_sam_pallas.1} parent=1 // loop_header
      %s11 = sphi 0, %s15
      %p12 = scmp.ge.s32.totalorder %s11, 4
      %s18 = sphi 0, %s30
      %s19 = sphi 0, %s26
      %s20 = sphi 0, %s18
      %s21 = sphi 0, %s19
      %s22 = sphi 0, %s20
      %s23 = sphi 0, %s21
      %s35 = sphi 0, %s37
      %s38 = sphi 0, %s35
      %s39 = sphi 0, %s38
      %s55 = sphi 0, %s39
      %s59 = sphi 0, %s59
      %s61 = sphi 0, %s59
      %s62 = sphi 0, %s61
      %s76 = sphi 0, %s62
      %s80 = sphi 0, %s80
      %s82 = sphi 0, %s80
      %s83 = sphi 0, %s82
      %s97 = sphi 0, %s83
      %s105 = sphi 0, %s107
      %s108 = sphi 0, %s105
      %s109 = sphi 0, %s108
      %s125 = sphi 0, %s109
    $region4: #{attention_sam_pallas.1} parent=1 // loop_header_branch
      %14 = sbr.rel (%p12) target = $region8
    $region5: #{attention_sam_pallas.1} parent=1 // loop_body
      %s16 = ssub.s32 %s11, 1
      %s17 = ssub.s32 %s11, 2
      %s24 = sadd.s32 1, %s19
      %p25 = scmp.ge.s32.totalorder %s24, 1
      %s26 = scalar_select %p25, 0, %s24
      %s27 = sadd.s32 1, %s18
      %s28 = scalar_select %p25, %s27, %s18
      %p29 = scmp.ge.s32.totalorder %s28, 2
      %s30 = scalar_select %p29, 0, %s28
      %s31 = ssub.s32 %s18, %s30
      %s32 = ssub.s32 %s19, %s26
      %s33 = sor.u32 %s31, %s32
      %p34 = scmp.eq.s32.totalorder %s33, 0
      %s36 = sadd.s32 %s35, 1
      %s37 = scalar_select %p34, %s35, %s36
      %p40 = pneg %p34
      %p41 = scmp.eq.s32.totalorder %s11, 1
      %p42 = por %p40, %p41
      %p43 = scmp.ne.s32.totalorder %s35, %s38
      %p44 = scmp.eq.s32.totalorder %s11, 0
      %p45 = por %p43, %p44
      %p46 = scmp.ne.s32.totalorder %s35, %s38
      %p47 = scmp.eq.s32.totalorder %s16, 1
      %p48 = por %p46, %p47
      %p49 = scmp.ne.s32.totalorder %s38, %s39
      %p50 = scmp.eq.s32.totalorder %s16, 0
      %p51 = por %p49, %p50
      %p52 = scmp.ne.s32.totalorder %s38, %s39
      %p53 = scmp.eq.s32.totalorder %s17, 1
      %p54 = por %p52, %p53
      %p56 = scmp.ne.s32.totalorder %s39, %s55
      %p57 = scmp.eq.s32.totalorder %s17, 0
      %p58 = por %p56, %p57
      %s60 = sadd.s32 %s59, 1
      %p63 = scmp.eq.s32.totalorder %s11, 1
      %p64 = scmp.ne.s32.totalorder %s59, %s61
      %p65 = scmp.eq.s32.totalorder %s11, 0
      %p66 = por %p64, %p65
      %p67 = scmp.ne.s32.totalorder %s59, %s61
      %p68 = scmp.eq.s32.totalorder %s16, 1
      %p69 = por %p67, %p68
      %p70 = scmp.ne.s32.totalorder %s61, %s62
      %p71 = scmp.eq.s32.totalorder %s16, 0
      %p72 = por %p70, %p71
      %p73 = scmp.ne.s32.totalorder %s61, %s62
      %p74 = scmp.eq.s32.totalorder %s17, 1
      %p75 = por %p73, %p74
      %p77 = scmp.ne.s32.totalorder %s62, %s76
      %p78 = scmp.eq.s32.totalorder %s17, 0
      %p79 = por %p77, %p78
      %s81 = sadd.s32 %s80, 1
      %p84 = scmp.eq.s32.totalorder %s11, 1
      %p85 = scmp.ne.s32.totalorder %s80, %s82
      %p86 = scmp.eq.s32.totalorder %s11, 0
      %p87 = por %p85, %p86
      %p88 = scmp.ne.s32.totalorder %s80, %s82
      %p89 = scmp.eq.s32.totalorder %s16, 1
      %p90 = por %p88, %p89
      %p91 = scmp.ne.s32.totalorder %s82, %s83
      %p92 = scmp.eq.s32.totalorder %s16, 0
      %p93 = por %p91, %p92
      %p94 = scmp.ne.s32.totalorder %s82, %s83
      %p95 = scmp.eq.s32.totalorder %s17, 1
      %p96 = por %p94, %p95
      %p98 = scmp.ne.s32.totalorder %s83, %s97
      %p99 = scmp.eq.s32.totalorder %s17, 0
      %p100 = por %p98, %p99
      %s101 = ssub.s32 %s18, %s30
      %s102 = ssub.s32 %s19, %s26
      %s103 = sor.u32 %s101, %s102
      %p104 = scmp.eq.s32.totalorder %s103, 0
      %s106 = sadd.s32 %s105, 1
      %s107 = scalar_select %p104, %s105, %s106
      %p110 = pneg %p104
      %p111 = scmp.eq.s32.totalorder %s11, 1
      %p112 = por %p110, %p111
      %p113 = scmp.ne.s32.totalorder %s105, %s108
      %p114 = scmp.eq.s32.totalorder %s11, 0
      %p115 = por %p113, %p114
      %p116 = scmp.ne.s32.totalorder %s105, %s108
      %p117 = scmp.eq.s32.totalorder %s16, 1
      %p118 = por %p116, %p117
      %p119 = scmp.ne.s32.totalorder %s108, %s109
      %p120 = scmp.eq.s32.totalorder %s16, 0
      %p121 = por %p119, %p120
      %p122 = scmp.ne.s32.totalorder %s108, %s109
      %p123 = scmp.eq.s32.totalorder %s17, 1
      %p124 = por %p122, %p123
      %p126 = scmp.ne.s32.totalorder %s109, %s125
      %p127 = scmp.eq.s32.totalorder %s17, 0
      %p128 = por %p126, %p127
      %p129 = scmp.le.s32.totalorder 1, %s11
      %p130 = scmp.lt.s32.totalorder %s11, 3
      %p131 = pnand %p129, %p130
      %p132 = pneg %p131
      // Predicated region
      $region9: #{attention_sam_pallas.1} parent=5 // pred_check
        _
      $region10: #{attention_sam_pallas.1} parent=5 // pred_check_branch
        %134 = sbr.rel (%p131) target = $region12
      $region11: #{attention_sam_pallas.1} parent=5 // pred_region
        %s135 = ssub.s32 %s11, 1
        // Predicated region
        $region13: #{attention_sam_pallas.1} parent=11 // pred_check
          %p136 = pneg %p72
        $region14: #{attention_sam_pallas.1} parent=11 // pred_check_branch
          %138 = sbr.rel (%p136) target = $region16
        $region15: #{attention_sam_pallas.1} parent=11 // pred_region
          %s140 = ssub.s32 64, 64
          %141 = vsyncadd [#allocation3], %s140
          %s143 = sshll.u32 %s1, 4
          %s144 = int_to_ptr.vmem [resolvable:$true] %s143
          %146 = dma.vmem_to_smem %s144, 64, [#allocation2], [#allocation3]
        $region16: #{attention_sam_pallas.1} parent=11 // pred_fallthru
          _
        // Predicated region
        $region17: #{attention_sam_pallas.1} parent=11 // pred_check
          %p147 = pneg %p93
        $region18: #{attention_sam_pallas.1} parent=11 // pred_check_branch
          %149 = sbr.rel (%p147) target = $region20
        $region19: #{attention_sam_pallas.1} parent=11 // pred_region
          %s151 = ssub.s32 16, 16
          %152 = vsyncadd [#allocation5], %s151
          %s154 = sshll.u32 %s2, 4
          %s155 = int_to_ptr.vmem [resolvable:$true] %s154
          %157 = dma.vmem_to_smem %s155, 16, [#allocation4], [#allocation5]
        $region20: #{attention_sam_pallas.1} parent=11 // pred_fallthru
          _
      $region12: #{attention_sam_pallas.1} parent=5 // pred_fallthru
        _
      %p158 = scmp.lt.s32.totalorder %s11, 2
      // Predicated region
      $region21: #{attention_sam_pallas.1} parent=5 // pred_check
        %p159 = pneg %p158
      $region22: #{attention_sam_pallas.1} parent=5 // pred_check_branch
        %161 = sbr.rel (%p159) target = $region24
      $region23: #{attention_sam_pallas.1} parent=5 // pred_region
        // Predicated region
        $region25: #{attention_sam_pallas.1} parent=23 // pred_check
          %p162 = pneg %p45
        $region26: #{attention_sam_pallas.1} parent=23 // pred_check_branch
          %164 = sbr.rel (%p162) target = $region28
        $region27: #{attention_sam_pallas.1} parent=23 // pred_region
          %p165 = scmp.lt.s32.totalorder %s18, 1
          %s166 = scalar_select %p165, %s18, 1
          %p167 = scmp.lt.s32.totalorder %s19, 0
          %s168 = scalar_select %p167, %s19, 0
          %s169 = smul.addr %s166, 4
          %s170 = sadd.s32 %s168, %s169
          %s171 = smul.addr %s170, 2
          %s172 = scalar_lea.vmem %s0, %s171
        $region28: #{attention_sam_pallas.1} parent=23 // pred_fallthru
          _
      $region24: #{attention_sam_pallas.1} parent=5 // pred_fallthru
        _
      %p173 = scmp.le.s32.totalorder 1, %s11
      %p174 = scmp.lt.s32.totalorder %s11, 3
      %p175 = pnand %p173, %p174
      %p176 = pneg %p175
      // Predicated region
      $region29: #{attention_sam_pallas.1} parent=5 // pred_check
        _
      $region30: #{attention_sam_pallas.1} parent=5 // pred_check_branch
        %178 = sbr.rel (%p175) target = $region32
      $region31: #{attention_sam_pallas.1} parent=5 // pred_region
        %s179 = ssub.s32 %s11, 1
        // Predicated region
        $region33: #{attention_sam_pallas.1} parent=31 // pred_check
          %p180 = pneg %p72
        $region34: #{attention_sam_pallas.1} parent=31 // pred_check_branch
          %182 = sbr.rel (%p180) target = $region36
        $region35: #{attention_sam_pallas.1} parent=31 // pred_region
          %183 = dma.done [#allocation3], 64
        $region36: #{attention_sam_pallas.1} parent=31 // pred_fallthru
          _
        // Predicated region
        $region37: #{attention_sam_pallas.1} parent=31 // pred_check
          %p184 = pneg %p93
        $region38: #{attention_sam_pallas.1} parent=31 // pred_check_branch
          %186 = sbr.rel (%p184) target = $region40
        $region39: #{attention_sam_pallas.1} parent=31 // pred_region
          %187 = dma.done [#allocation5], 16
        $region40: #{attention_sam_pallas.1} parent=31 // pred_fallthru
          _
        %188 = sfence
        %p189 = scmp.lt.s32.totalorder %s20, 1
        %s190 = scalar_select %p189, %s20, 1
        %p191 = scmp.lt.s32.totalorder %s21, 0
        %s192 = scalar_select %p191, %s21, 0
        %s193 = smul.addr %s190, 4
        %s194 = sadd.s32 %s192, %s193
        %s195 = smul.addr %s194, 2
        %s196 = scalar_lea.vmem %s0, %s195
        %p197 = pneg %p51
        %p198 = pneg %p48
        %p199 = pneg %p72
        %p200 = pneg %p69
        %p201 = pneg %p93
        %p202 = pneg %p90
        %p203 = pneg %p121
        %p204 = pneg %p118
        %p205 = scmp.lt.s32.totalorder %s20, 1
        %s206 = scalar_select %p205, %s20, 1
        %p207 = scmp.lt.s32.totalorder %s21, 0
        %s208 = scalar_select %p207, %s21, 0
        %s209 = smul.addr %s206, 4
        %s210 = sadd.s32 %s208, %s209
        %s211 = smul.addr %s210, 2
        %s212 = scalar_lea.vmem %s3, %s211
        %p213 = scmp.lt.s32.totalorder %s20, 1
        %s214 = scalar_select %p213, %s20, 1
        %p215 = scmp.lt.s32.totalorder %s21, 0
        %s216 = scalar_select %p215, %s21, 0
        %s217 = smul.addr %s214, 4
        %s218 = sadd.s32 %s216, %s217
        %s219 = smul.addr %s218, 2
        %s220 = scalar_lea.vmem %s0, %s219
        %p221 = scmp.lt.s32.totalorder %s20, 1
        %s222 = scalar_select %p221, %s20, 1
        %p223 = scmp.lt.s32.totalorder %s21, 0
        %s224 = scalar_select %p223, %s21, 0
        %s225 = smul.addr %s222, 4
        %s226 = sadd.s32 %s224, %s225
        %s227 = smul.addr %s226, 2
        %s228 = scalar_lea.vmem %s3, %s227
        %s229 = sld [smem:[#allocation2]]
        %s230 = sld [smem:[#allocation2 + $0x1]]
        %s231 = sld [smem:[#allocation2 + $0x2]]
        %s232 = sld [smem:[#allocation2 + $0x3]]
        %s233 = sld [smem:[#allocation2 + $0x80]]
        %s234 = sld [smem:[#allocation2 + $0x81]]
        %s235 = sld [smem:[#allocation2 + $0x82]]
        %s236 = sld [smem:[#allocation2 + $0x83]]
        %s237 = sld [smem:[#allocation2 + $0x100]]
        %s238 = sld [smem:[#allocation2 + $0x101]]
        %s239 = sld [smem:[#allocation2 + $0x102]]
        %s240 = sld [smem:[#allocation2 + $0x103]]
        %s241 = sld [smem:[#allocation2 + $0x180]]
        %s242 = sld [smem:[#allocation2 + $0x181]]
        %s243 = sld [smem:[#allocation2 + $0x182]]
        %s244 = sld [smem:[#allocation2 + $0x183]]
        %s245 = sld [smem:[#allocation4]]
        %s246 = sld [smem:[#allocation4 + $0x1]]
        %s247 = sld [smem:[#allocation4 + $0x2]]
        %s248 = sld [smem:[#allocation4 + $0x3]]
        %v249 = vld [vmem:[%s220] sm:$0x3]
        %s250 = sadd.s32 0, 2
        %s251 = scalar_lea.vmem %s220, %s250
        %v252 = vld [vmem:[%s251] sm:$0x3]
        %s253 = sadd.s32 0, 4
        %s254 = scalar_lea.vmem %s220, %s253
        %v255 = vld [vmem:[%s254] sm:$0x3]
        %s256 = sadd.s32 0, 6
        %s257 = scalar_lea.vmem %s220, %s256
        %v258 = vld [vmem:[%s257] sm:$0x3]
        %v259 = vstv %s229
        %v260 = vmul.f32 %v249, %v259
        %v261 = vstv %s230
        %v262 = vmul.f32 %v252, %v261
        %v263 = vadd.f32 %v260, %v262
        %v264 = vstv %s231
        %v265 = vmul.f32 %v255, %v264
        %v266 = vadd.f32 %v263, %v265
        %v267 = vstv %s232
        %v268 = vmul.f32 %v258, %v267
        %v269 = vadd.f32 %v266, %v268
        %v270 = vstv %s245
        %v271 = vadd.f32 %v269, %v270
        %v272 = vmax.f32 %v271, -30.0
        %v273 = vsub.f32 0.0, %v272
        %v274 = vmul.f32 %v273, 1.442695
        %v275 = vpow.pop %v274
        %v276 = vadd.f32 %v275, 1.0
        %v277 = vrcp.pop %v276
        %v278 = vmul.f32 %v276, %v277
        %v279 = vsub.f32 2.0, %v278
        %v280 = vmul.f32 %v277, %v279
        %v281 = vmul.f32 %v280, %v249
        %282 = vst [vmem:[%s228] sm:$0x3] %v281
        %v283 = vstv %s233
        %v284 = vmul.f32 %v249, %v283
        %v285 = vstv %s234
        %v286 = vmul.f32 %v252, %v285
        %v287 = vadd.f32 %v284, %v286
        %v288 = vstv %s235
        %v289 = vmul.f32 %v255, %v288
        %v290 = vadd.f32 %v287, %v289
        %v291 = vstv %s236
        %v292 = vmul.f32 %v258, %v291
        %v293 = vadd.f32 %v290, %v292
        %v294 = vstv %s246
        %v295 = vadd.f32 %v293, %v294
        %v296 = vmax.f32 %v295, -30.0
        %v297 = vsub.f32 0.0, %v296
        %v298 = vmul.f32 %v297, 1.442695
        %v299 = vpow.pop %v298
        %v300 = vadd.f32 %v299, 1.0
        %v301 = vrcp.pop %v300
        %v302 = vmul.f32 %v300, %v301
        %v303 = vsub.f32 2.0, %v302
        %v304 = vmul.f32 %v301, %v303
        %v305 = vmul.f32 %v304, %v252
        %s306 = scalar_lea.vmem %s228, %s250
        %307 = vst [vmem:[%s306] sm:$0x3] %v305
        %v308 = vstv %s237
        %v309 = vmul.f32 %v249, %v308
        %v310 = vstv %s238
        %v311 = vmul.f32 %v252, %v310
        %v312 = vadd.f32 %v309, %v311
        %v313 = vstv %s239
        %v314 = vmul.f32 %v255, %v313
        %v315 = vadd.f32 %v312, %v314
        %v316 = vstv %s240
        %v317 = vmul.f32 %v258, %v316
        %v318 = vadd.f32 %v315, %v317
        %v319 = vstv %s247
        %v320 = vadd.f32 %v318, %v319
        %v321 = vmax.f32 %v320, -30.0
        %v322 = vsub.f32 0.0, %v321
        %v323 = vmul.f32 %v322, 1.442695
        %v324 = vpow.pop %v323
        %v325 = vadd.f32 %v324, 1.0
        %v326 = vrcp.pop %v325
        %v327 = vmul.f32 %v325, %v326
        %v328 = vsub.f32 2.0, %v327
        %v329 = vmul.f32 %v326, %v328
        %v330 = vmul.f32 %v329, %v255
        %s331 = scalar_lea.vmem %s228, %s253
        %332 = vst [vmem:[%s331] sm:$0x3] %v330
        %v333 = vstv %s241
        %v334 = vmul.f32 %v249, %v333
        %v335 = vstv %s242
        %v336 = vmul.f32 %v252, %v335
        %v337 = vadd.f32 %v334, %v336
        %v338 = vstv %s243
        %v339 = vmul.f32 %v255, %v338
        %v340 = vadd.f32 %v337, %v339
        %v341 = vstv %s244
        %v342 = vmul.f32 %v258, %v341
        %v343 = vadd.f32 %v340, %v342
        %v344 = vstv %s248
        %v345 = vadd.f32 %v343, %v344
        %v346 = vmax.f32 %v345, -30.0
        %v347 = vsub.f32 0.0, %v346
        %v348 = vmul.f32 %v347, 1.442695
        %v349 = vpow.pop %v348
        %v350 = vadd.f32 %v349, 1.0
        %v351 = vrcp.pop %v350
        %v352 = vmul.f32 %v350, %v351
        %v353 = vsub.f32 2.0, %v352
        %v354 = vmul.f32 %v351, %v353
        %v355 = vmul.f32 %v354, %v258
        %s356 = scalar_lea.vmem %s228, %s256
        %357 = vst [vmem:[%s356] sm:$0x3] %v355
        %p358 = scmp.lt.s32.totalorder %s20, 1
        %s359 = scalar_select %p358, %s20, 1
        %p360 = scmp.lt.s32.totalorder %s21, 0
        %s361 = scalar_select %p360, %s21, 0
        %s362 = smul.addr %s359, 4
        %s363 = sadd.s32 %s361, %s362
        %s364 = smul.addr %s363, 2
        %s365 = scalar_lea.vmem %s3, %s364
        // Predicated region
        $region41: #{attention_sam_pallas.1} parent=31 // pred_check
          %p366 = pneg %p118
        $region42: #{attention_sam_pallas.1} parent=31 // pred_check_branch
          %368 = sbr.rel (%p366) target = $region44
        $region43: #{attention_sam_pallas.1} parent=31 // pred_region
          _
        $region44: #{attention_sam_pallas.1} parent=31 // pred_fallthru
          _
      $region32: #{attention_sam_pallas.1} parent=5 // pred_fallthru
        _
      %p369 = scmp.le.s32.totalorder 2, %s11
      // Predicated region
      $region45: #{attention_sam_pallas.1} parent=5 // pred_check
        %p370 = pneg %p369
      $region46: #{attention_sam_pallas.1} parent=5 // pred_check_branch
        %372 = sbr.rel (%p370) target = $region48
      $region47: #{attention_sam_pallas.1} parent=5 // pred_region
        %s373 = ssub.s32 %s11, 2
        // Predicated region
        $region49: #{attention_sam_pallas.1} parent=47 // pred_check
          %p374 = pneg %p124
        $region50: #{attention_sam_pallas.1} parent=47 // pred_check_branch
          %376 = sbr.rel (%p374) target = $region52
        $region51: #{attention_sam_pallas.1} parent=47 // pred_region
          %p377 = scmp.lt.s32.totalorder %s22, 1
          %s378 = scalar_select %p377, %s22, 1
          %p379 = scmp.lt.s32.totalorder %s23, 0
          %s380 = scalar_select %p379, %s23, 0
          %s381 = smul.addr %s378, 4
          %s382 = sadd.s32 %s380, %s381
          %s383 = smul.addr %s382, 2
          %s384 = scalar_lea.vmem %s3, %s383
        $region52: #{attention_sam_pallas.1} parent=47 // pred_fallthru
          _
      $region48: #{attention_sam_pallas.1} parent=5 // pred_fallthru
        _
    $region6: #{attention_sam_pallas.1} parent=1 // loop_footer
      %s15 = sadd.s32 1, %s11
    $region7: #{attention_sam_pallas.1} parent=1 // loop_footer_branch
      %10 = sbr.rel target = $region3
    $region8: #{attention_sam_pallas.1} parent=1 // loop_exit
      _
    %385 = vsyncpa [#allocation3], 1
    %s386 = scalar_lea.sflag [#allocation3], 1
    %387 = vsyncpa %s386, 1
    %388 = vsyncpa [#allocation5], 1

</llo_original>
